<compile_context>
chip_gen: v7x
topology: tpu7x:2x2x1
jax: 0.10.0
libtpu: 0.0.40
codegen_flags: <defaults>
</compile_context>

<pallas_src>
import functools

import jax
import jax.numpy as jnp
from jax.experimental import pallas as pl
from jax.experimental.pallas import tpu as pltpu

LANE = 128


def _round_up(x, m):
    return ((x + m - 1) // m) * m


# ----------------------------- Pallas kernel --------------------------------

def mmoe_kernel(h_ref, wf_ref, wt_ref, bt_ref, out_ref, *,
                n_expert, num_task, m_block, g_block, sub_b):
    """One wide MXU pass (experts + gates), gate softmax + per-expert mixing on aligned
    128-lane blocks, then one block-diagonal tower matmul with a lane-dense output."""
    gate_base = n_expert * m_block
    wf = wf_ref[...]                    # (Haug, Nf)  resident fused expert+gate weight
    wt = wt_ref[...]                    # (T*Mb, TOpad) resident block-diag folded towers
    bt = bt_ref[...]                    # (1, TOpad)
    tile_b = h_ref.shape[0]
    n_chunks = tile_b // sub_b

    # Process the batch tile in sub_b-row chunks to bound vreg live ranges of `fused`.
    for c in range(n_chunks):
        r0, r1 = c * sub_b, (c + 1) * sub_b
        h = h_ref[r0:r1, :]                                          # (sub_b, Haug)

        # Bias already folded in via the ones column of h.
        fused = jnp.dot(h, wf, preferred_element_type=jnp.float32)   # (sub_b, Nf)

        mixes = []
        for t in range(num_task):
            base = gate_base + t * g_block
            logits = fused[:, base:base + g_block]                   # aligned 128-lane block
            m = jnp.max(logits, axis=-1, keepdims=True)
            p = jnp.exp(logits - m)                                  # padding lanes -> 0
            denom = jnp.sum(p, axis=-1, keepdims=True)
            g = p * pl.reciprocal(denom, approx=False)               # (sub_b, g_block)

            # Expert blocks are 128-lane aligned; padding lanes are exact zeros.
            mt = fused[:, 0:m_block] * g[:, 0:1]
            for e in range(1, n_expert):
                mt = mt + fused[:, e * m_block:(e + 1) * m_block] * g[:, e:e + 1]
            mixes.append(mt)                                         # (sub_b, Mb)

        mixed_cat = jnp.concatenate(mixes, axis=-1) if num_task > 1 else mixes[0]

        # Both (pre-folded, fully affine) towers in one MXU pass; (sub_b, TOpad) is
        # lane-dense (TOpad is a multiple of 128) -> unmasked stores.
        out_ref[r0:r1, :] = (
            jnp.dot(mixed_cat, wt, preferred_element_type=jnp.float32) + bt)


def mmoe_forward_pallas(hidden, w_fused_aug, w_tower, b_tower, *,
                        n_expert, mmoe_hidden, num_task, output_size,
                        tile_b=256):
    B, H = hidden.shape
    Haug, Nf = w_fused_aug.shape
    TMb, TOpad = w_tower.shape
    Mb = TMb // num_task
    g_block = (Nf - n_expert * Mb) // num_task

    # v7x has 2 TensorCores: keep >= 2 grid steps when the batch allows it, and cap
    # tile_b at 256 (128-row sub-chunks inside the kernel bound vreg live ranges).
    tile_b = min(tile_b, max(8, _round_up(pl.cdiv(B, 2), 8)))
    if tile_b > 128:
        tile_b = (tile_b // 128) * 128
        sub_b = 128
    else:
        tile_b = _round_up(tile_b, 8)
        sub_b = tile_b

    # Fold the fused expert/gate bias into the matmul: append a ones column and pad to Haug.
    h_aug = jnp.concatenate(
        [hidden.astype(jnp.float32),
         jnp.ones((B, 1), jnp.float32),
         jnp.zeros((B, Haug - H - 1), jnp.float32)], axis=1)

    kernel = functools.partial(mmoe_kernel, n_expert=n_expert, num_task=num_task,
                               m_block=Mb, g_block=g_block, sub_b=sub_b)

    # Explicit scoped-VMEM budget from buffer arithmetic (double-buffered tiles + resident
    # weights) + headroom, capped at 64 MiB -- never rely on per-generation defaults.
    f32 = 4
    buf_bytes = (2 * (tile_b * Haug + tile_b * TOpad)
                 + 2 * (Haug * Nf + TMb * TOpad + TOpad)) * f32
    vmem_limit = int(min(64 * 2 ** 20, buf_bytes + 8 * 2 ** 20))

    out_packed = pl.pallas_call(
        kernel,
        out_shape=jax.ShapeDtypeStruct((B, TOpad), jnp.float32),
        grid_spec=pltpu.PrefetchScalarGridSpec(
            num_scalar_prefetch=0,
            grid=(pl.cdiv(B, tile_b),),
            in_specs=[
                pl.BlockSpec((tile_b, Haug), lambda i: (i, 0)),   # hidden tile (+ ones col)
                pl.BlockSpec((Haug, Nf), lambda i: (0, 0)),       # fused expert+gate weight
                pl.BlockSpec((TMb, TOpad), lambda i: (0, 0)),     # block-diag folded towers
                pl.BlockSpec((1, TOpad), lambda i: (0, 0)),       # folded tower bias
            ],
            out_specs=pl.BlockSpec((tile_b, TOpad), lambda i: (i, 0)),
        ),
        compiler_params=pltpu.CompilerParams(
            dimension_semantics=("parallel",),
            vmem_limit_bytes=vmem_limit),
    )(h_aug, w_fused_aug, w_tower, b_tower)

    # (B, TOpad) -> slice real columns -> (T, B, out)
    TO = num_task * output_size
    return jnp.transpose(out_packed[:, :TO].reshape(B, num_task, output_size), (1, 0, 2))


# ----------------------------- wrapper-side folding ---------------------------

def pack_mmoe_params(experts_hme, ebias_me, gates, gbias,
                     w1, b1, w2, b2, w3, b3, bn1, bn2,
                     eps=1e-5, neg_inf=-1e30):
    """Fuse experts+gates into one wide weight laid out in 128-lane-aligned blocks, fold
    the bias into an extra hidden row (ones-column trick), fold eval-mode BN into the
    linears, and collapse the fully-affine task towers into one block-diagonal matmul
    padded to a lane-dense (multiple-of-128) output."""
    H, M, E = experts_hme.shape
    T = gates.shape[0]
    out_size = w3.shape[-1]
    assert E <= LANE, "n_expert must fit inside one 128-lane gate block"

    Mb = _round_up(M, LANE)    # each expert gets its own 128-lane-aligned block
    Gb = LANE                  # each task's gate logits get their own aligned block

    # --- expert blocks: lanes [e*Mb, e*Mb+M) hold expert e; padding lanes are zero ---
    w_exp = jnp.zeros((H, E * Mb), jnp.float32)
    b_exp = jnp.zeros((1, E * Mb), jnp.float32)
    for e in range(E):
        w_exp = w_exp.at[:, e * Mb:e * Mb + M].set(experts_hme[:, :, e])
        b_exp = b_exp.at[:, e * Mb:e * Mb + M].set(ebias_me[:, e][None, :])

    # --- gate blocks: lanes [t*Gb, t*Gb+E) are task t's logits; padding lanes get a
    #     -1e30 bias so exp() underflows to 0 in the in-kernel softmax ---
    w_gate = jnp.zeros((H, T * Gb), jnp.float32)
    b_gate = jnp.full((1, T * Gb), neg_inf, jnp.float32)
    for t in range(T):
        w_gate = w_gate.at[:, t * Gb:t * Gb + E].set(gates[t])
        b_gate = b_gate.at[:, t * Gb:t * Gb + E].set(gbias[t][None, :])

    w_fused = jnp.concatenate([w_exp, w_gate], axis=1)             # (H, Nf)
    b_fused = jnp.concatenate([b_exp, b_gate], axis=1)             # (1, Nf)

    # --- fold bias into the matmul (hidden gets a ones column); pad rows to x8 ---
    Haug = _round_up(H + 1, 8)
    w_fused_aug = jnp.zeros((Haug, w_fused.shape[1]), jnp.float32)
    w_fused_aug = w_fused_aug.at[:H].set(w_fused)
    w_fused_aug = w_fused_aug.at[H].set(b_fused[0])

    # --- fold BN (eval) into the linears; tower has no nonlinearity -> single affine ---
    (gamma1, beta1, mean1, var1) = bn1
    (gamma2, beta2, mean2, var2) = bn2
    s1 = gamma1 / jnp.sqrt(var1 + eps); sh1 = beta1 - mean1 * s1     # (T,1,D1)
    s2 = gamma2 / jnp.sqrt(var2 + eps); sh2 = beta2 - mean2 * s2     # (T,1,D2)
    w1f = w1 * s1; b1f = b1 * s1 + sh1
    w2f = w2 * s2; b2f = b2 * s2 + sh2
    Wt = jnp.einsum('tij,tjk,tkl->til', w1f, w2f, w3)                # (T, M, out)
    bt = jnp.einsum('tij,tjk->tik',
                    jnp.einsum('tij,tjk->tik', b1f, w2f) + b2f, w3) + b3   # (T, 1, out)

    # --- block-diagonal tower over the Mb-padded mixes; output padded to 128 lanes ---
    TOpad = _round_up(T * out_size, LANE)
    w_tower = jnp.zeros((T * Mb, TOpad), jnp.float32)
    b_tower = jnp.zeros((1, TOpad), jnp.float32)
    for t in range(T):
        w_tower = w_tower.at[t * Mb:t * Mb + M,
                             t * out_size:(t + 1) * out_size].set(Wt[t])
        b_tower = b_tower.at[:, t * out_size:(t + 1) * out_size].set(bt[t])

    return w_fused_aug, w_tower, b_tower


# ----------------------------- JAX glue / reference --------------------------

def build_hidden(x, user_emb_table, item_emb_table):
    """Embedding gather + concat (mirrors the PyTorch forward's cat order)."""
    user_id = x[:, 0].astype(jnp.int32)
    user_age = x[:, 1:2]
    item_id = x[:, 2].astype(jnp.int32)
    item_price = x[:, 3:4]
    user_embed = jnp.concatenate([user_emb_table[user_id], user_age], axis=1)
    item_embed = jnp.concatenate([item_emb_table[item_id], item_price], axis=1)
    return jnp.concatenate([user_embed, item_embed], axis=1).astype(jnp.float32)


def mmoe_reference(hidden, experts_hme, ebias_me, gates, gbias,
                   w1, b1, w2, b2, w3, b3, bn1, bn2, eps=1e-5):
    """Pure-JAX reference mirroring the torch forward (unfolded BN, chained linears)."""
    (gamma1, beta1, mean1, var1) = bn1
    (gamma2, beta2, mean2, var2) = bn2
    experts_out = jnp.einsum('ij,jkl->ikl', hidden, experts_hme) + ebias_me  # (B, M, E)
    outs = []
    for t in range(gates.shape[0]):
        g = jax.nn.softmax(hidden @ gates[t] + gbias[t], axis=-1)            # (B, E)
        mixed = jnp.sum(experts_out * g[:, None, :], axis=2)                 # (B, M)
        x = mixed @ w1[t] + b1[t]
        x = (x - mean1[t]) / jnp.sqrt(var1[t] + eps) * gamma1[t] + beta1[t]  # BN eval
        x = x @ w2[t] + b2[t]
        x = (x - mean2[t]) / jnp.sqrt(var2[t] + eps) * gamma2[t] + beta2[t]  # BN eval
        x = x @ w3[t] + b3[t]
        outs.append(x)
    return jnp.stack(outs, axis=0)


# ----------------------------- main ------------------------------------------

if __name__ == "__main__":
    # Small config consistent with the module's __init__
    #   user_feature_dict = {'user_id': (100, 0), 'user_age': (1, 1)}
    #   item_feature_dict = {'item_id': (50, 2),  'item_price': (1, 3)}
    B = 8
    emb_dim = 16
    n_expert = 3
    mmoe_hidden_dim = 32
    hidden_dim = [32, 16]
    output_size = 1
    num_task = 2
    n_user_vocab, n_item_vocab = 100, 50
    H = emb_dim * 2 + 1 + 1  # hidden_size = 34

    key = jax.random.PRNGKey(0)
    keys = jax.random.split(key, 24)

    # Embedding tables (glue params)
    user_emb_table = jax.random.normal(keys[0], (n_user_vocab, emb_dim), jnp.float32)
    item_emb_table = jax.random.normal(keys[1], (n_item_vocab, emb_dim), jnp.float32)

    # MMoE parameters (torch shapes: experts (H, M, E), experts_bias (M, E))
    experts_hme = jax.random.normal(keys[2], (H, mmoe_hidden_dim, n_expert), jnp.float32)
    ebias_me = jax.random.normal(keys[3], (mmoe_hidden_dim, n_expert), jnp.float32)
    gates = jax.random.normal(keys[4], (num_task, H, n_expert), jnp.float32)
    gbias = jax.random.normal(keys[5], (num_task, n_expert), jnp.float32)

    # Task towers: Linear(M,D1) -> BN(D1) -> Dropout -> Linear(D1,D2) -> BN(D2) -> Dropout -> Linear(D2,1)
    D1, D2 = hidden_dim
    w1 = jax.random.normal(keys[6], (num_task, mmoe_hidden_dim, D1), jnp.float32) * 0.1
    b1 = jax.random.normal(keys[7], (num_task, 1, D1), jnp.float32) * 0.1
    w2 = jax.random.normal(keys[8], (num_task, D1, D2), jnp.float32) * 0.1
    b2 = jax.random.normal(keys[9], (num_task, 1, D2), jnp.float32) * 0.1
    w3 = jax.random.normal(keys[10], (num_task, D2, output_size), jnp.float32) * 0.1
    b3 = jax.random.normal(keys[11], (num_task, 1, output_size), jnp.float32) * 0.1

    # BatchNorm1d eval-mode parameters (non-trivial running stats so the fold is exercised)
    gamma1 = 1.0 + 0.1 * jax.random.normal(keys[16], (num_task, 1, D1), jnp.float32)
    beta1 = 0.1 * jax.random.normal(keys[17], (num_task, 1, D1), jnp.float32)
    mean1 = 0.1 * jax.random.normal(keys[18], (num_task, 1, D1), jnp.float32)
    var1 = 1.0 + 0.1 * jax.random.uniform(keys[19], (num_task, 1, D1), jnp.float32)
    gamma2 = 1.0 + 0.1 * jax.random.normal(keys[20], (num_task, 1, D2), jnp.float32)
    beta2 = 0.1 * jax.random.normal(keys[21], (num_task, 1, D2), jnp.float32)
    mean2 = 0.1 * jax.random.normal(keys[22], (num_task, 1, D2), jnp.float32)
    var2 = 1.0 + 0.1 * jax.random.uniform(keys[23], (num_task, 1, D2), jnp.float32)
    bn1 = (gamma1, beta1, mean1, var1)
    bn2 = (gamma2, beta2, mean2, var2)

    # Example input x: (B, 4) = [user_id, user_age, item_id, item_price]
    uid = jax.random.randint(keys[12], (B,), 0, n_user_vocab).astype(jnp.float32)
    iid = jax.random.randint(keys[13], (B,), 0, n_item_vocab).astype(jnp.float32)
    uage = jax.random.normal(keys[14], (B,), jnp.float32)
    iprice = jax.random.normal(keys[15], (B,), jnp.float32)
    x = jnp.stack([uid, uage, iid, iprice], axis=1)          # (B, 4)

    # Glue: embeddings + concat
    hidden = build_hidden(x, user_emb_table, item_emb_table)  # (B, H)

    # Wrapper-side algebraic fusion / folding (block-aligned layout + bias fold)
    w_fused_aug, w_tower, b_tower = pack_mmoe_params(
        experts_hme, ebias_me, gates, gbias, w1, b1, w2, b2, w3, b3, bn1, bn2)

    out = mmoe_forward_pallas(hidden, w_fused_aug, w_tower, b_tower,
                              n_expert=n_expert, mmoe_hidden=mmoe_hidden_dim,
                              num_task=num_task, output_size=output_size)
    out = jax.block_until_ready(out)                          # (num_task, B, output_size)

    # Correctness check against a pure-JAX reference of the torch forward
    ref = mmoe_reference(hidden, experts_hme, ebias_me, gates, gbias,
                         w1, b1, w2, b2, w3, b3, bn1, bn2)
    assert out.shape == (num_task, B, output_size)
    assert jnp.allclose(out, ref, atol=1e-4, rtol=1e-4), "mismatch vs reference"

    print("KERNEL_OK")
</pallas_src>

<mosaic_0001>
module attributes {stable_mosaic.version = 11 : i64} {
  func.func @mmoe_kernel(%arg0: i32, %arg1: memref<8x40xf32, #tpu.memory_space<vmem>>, %arg2: memref<40x640xf32, #tpu.memory_space<vmem>>, %arg3: memref<256x128xf32, #tpu.memory_space<vmem>>, %arg4: memref<1x128xf32, #tpu.memory_space<vmem>>, %arg5: memref<8x128xf32, #tpu.memory_space<vmem>>) attributes {dimension_semantics = [#tpu.dimension_semantics<parallel>], iteration_bounds = array<i64: 1>, scalar_prefetch = 0 : i64, scratch_operands = 0 : i64, tpu.core_type = #tpu.core_type<tc>, window_params = [{transform_indices = @transform_0, window_bounds = array<i64: 8, 40>}, {pipeline_mode = #tpu.pipeline_mode<synchronous>, transform_indices = @transform_1, window_bounds = array<i64: 40, 640>}, {pipeline_mode = #tpu.pipeline_mode<synchronous>, transform_indices = @transform_2, window_bounds = array<i64: 256, 128>}, {pipeline_mode = #tpu.pipeline_mode<synchronous>, transform_indices = @transform_3, window_bounds = array<i64: 1, 128>}, {transform_indices = @transform_4, window_bounds = array<i64: 8, 128>}]} {
    %c0 = arith.constant 0 : index
    %c0_0 = arith.constant 0 : index
    %0 = vector.load %arg2[%c0, %c0_0] : memref<40x640xf32, #tpu.memory_space<vmem>>, vector<40x640xf32>
    %c0_1 = arith.constant 0 : index
    %c0_2 = arith.constant 0 : index
    %1 = vector.load %arg3[%c0_1, %c0_2] : memref<256x128xf32, #tpu.memory_space<vmem>>, vector<256x128xf32>
    %c0_3 = arith.constant 0 : index
    %c0_4 = arith.constant 0 : index
    %2 = vector.load %arg4[%c0_3, %c0_4] : memref<1x128xf32, #tpu.memory_space<vmem>>, vector<1x128xf32>
    %c0_5 = arith.constant 0 : index
    %c0_6 = arith.constant 0 : index
    %3 = vector.load %arg1[%c0_5, %c0_6] : memref<8x40xf32, #tpu.memory_space<vmem>>, vector<8x40xf32>
    %cst = arith.constant dense<0.000000e+00> : vector<8x640xf32>
    %4 = tpu.matmul %3, %0, %cst {dimension_numbers = #tpu.dot_dimension_numbers<[1], [0], [0], [1], [0, 0, 1, 1], [], []>} : vector<8x40xf32>, vector<40x640xf32>, vector<8x640xf32> -> vector<8x640xf32>
    %5 = vector.extract_strided_slice %4 {offsets = [0, 384], sizes = [8, 128], strides = [1, 1]} : vector<8x640xf32> to vector<8x128xf32>
    %cst_7 = arith.constant dense<0xFF800000> : vector<8xf32>
    %6 = vector.multi_reduction <maximumf>, %5, %cst_7 [1] : vector<8x128xf32> to vector<8xf32>
    %7 = vector.shape_cast %6 : vector<8xf32> to vector<8x1xf32>
    %8 = vector.broadcast %7 : vector<8x1xf32> to vector<8x128xf32>
    %9 = arith.subf %5, %8 : vector<8x128xf32>
    %10 = math.exp %9 : vector<8x128xf32>
    %cst_8 = arith.constant dense<0.000000e+00> : vector<8xf32>
    %11 = vector.multi_reduction <add>, %10, %cst_8 [1] : vector<8x128xf32> to vector<8xf32>
    %12 = vector.shape_cast %11 : vector<8xf32> to vector<8x1xf32>
    %13 = tpu.reciprocal %12 : vector<8x1xf32> -> vector<8x1xf32>
    %14 = vector.broadcast %13 : vector<8x1xf32> to vector<8x128xf32>
    %15 = arith.mulf %10, %14 : vector<8x128xf32>
    %16 = vector.extract_strided_slice %4 {offsets = [0, 0], sizes = [8, 128], strides = [1, 1]} : vector<8x640xf32> to vector<8x128xf32>
    %17 = vector.extract_strided_slice %15 {offsets = [0, 0], sizes = [8, 1], strides = [1, 1]} : vector<8x128xf32> to vector<8x1xf32>
    %18 = vector.broadcast %17 : vector<8x1xf32> to vector<8x128xf32>
    %19 = arith.mulf %16, %18 : vector<8x128xf32>
    %20 = vector.extract_strided_slice %4 {offsets = [0, 128], sizes = [8, 128], strides = [1, 1]} : vector<8x640xf32> to vector<8x128xf32>
    %21 = vector.extract_strided_slice %15 {offsets = [0, 1], sizes = [8, 1], strides = [1, 1]} : vector<8x128xf32> to vector<8x1xf32>
    %22 = vector.broadcast %21 : vector<8x1xf32> to vector<8x128xf32>
    %23 = arith.mulf %20, %22 : vector<8x128xf32>
    %24 = arith.addf %19, %23 : vector<8x128xf32>
    %25 = vector.extract_strided_slice %4 {offsets = [0, 256], sizes = [8, 128], strides = [1, 1]} : vector<8x640xf32> to vector<8x128xf32>
    %26 = vector.extract_strided_slice %15 {offsets = [0, 2], sizes = [8, 1], strides = [1, 1]} : vector<8x128xf32> to vector<8x1xf32>
    %27 = vector.broadcast %26 : vector<8x1xf32> to vector<8x128xf32>
    %28 = arith.mulf %25, %27 : vector<8x128xf32>
    %29 = arith.addf %24, %28 : vector<8x128xf32>
    %30 = vector.extract_strided_slice %4 {offsets = [0, 512], sizes = [8, 128], strides = [1, 1]} : vector<8x640xf32> to vector<8x128xf32>
    %cst_9 = arith.constant dense<0xFF800000> : vector<8xf32>
    %31 = vector.multi_reduction <maximumf>, %30, %cst_9 [1] : vector<8x128xf32> to vector<8xf32>
    %32 = vector.shape_cast %31 : vector<8xf32> to vector<8x1xf32>
    %33 = vector.broadcast %32 : vector<8x1xf32> to vector<8x128xf32>
    %34 = arith.subf %30, %33 : vector<8x128xf32>
    %35 = math.exp %34 : vector<8x128xf32>
    %cst_10 = arith.constant dense<0.000000e+00> : vector<8xf32>
    %36 = vector.multi_reduction <add>, %35, %cst_10 [1] : vector<8x128xf32> to vector<8xf32>
    %37 = vector.shape_cast %36 : vector<8xf32> to vector<8x1xf32>
    %38 = tpu.reciprocal %37 : vector<8x1xf32> -> vector<8x1xf32>
    %39 = vector.broadcast %38 : vector<8x1xf32> to vector<8x128xf32>
    %40 = arith.mulf %35, %39 : vector<8x128xf32>
    %41 = vector.extract_strided_slice %4 {offsets = [0, 0], sizes = [8, 128], strides = [1, 1]} : vector<8x640xf32> to vector<8x128xf32>
    %42 = vector.extract_strided_slice %40 {offsets = [0, 0], sizes = [8, 1], strides = [1, 1]} : vector<8x128xf32> to vector<8x1xf32>
    %43 = vector.broadcast %42 : vector<8x1xf32> to vector<8x128xf32>
    %44 = arith.mulf %41, %43 : vector<8x128xf32>
    %45 = vector.extract_strided_slice %4 {offsets = [0, 128], sizes = [8, 128], strides = [1, 1]} : vector<8x640xf32> to vector<8x128xf32>
    %46 = vector.extract_strided_slice %40 {offsets = [0, 1], sizes = [8, 1], strides = [1, 1]} : vector<8x128xf32> to vector<8x1xf32>
    %47 = vector.broadcast %46 : vector<8x1xf32> to vector<8x128xf32>
    %48 = arith.mulf %45, %47 : vector<8x128xf32>
    %49 = arith.addf %44, %48 : vector<8x128xf32>
    %50 = vector.extract_strided_slice %4 {offsets = [0, 256], sizes = [8, 128], strides = [1, 1]} : vector<8x640xf32> to vector<8x128xf32>
    %51 = vector.extract_strided_slice %40 {offsets = [0, 2], sizes = [8, 1], strides = [1, 1]} : vector<8x128xf32> to vector<8x1xf32>
    %52 = vector.broadcast %51 : vector<8x1xf32> to vector<8x128xf32>
    %53 = arith.mulf %50, %52 : vector<8x128xf32>
    %54 = arith.addf %49, %53 : vector<8x128xf32>
    %55 = tpu.concatenate %29, %54 in 1 : vector<8x128xf32>, vector<8x128xf32> -> vector<8x256xf32>
    %cst_11 = arith.constant dense<0.000000e+00> : vector<8x128xf32>
    %56 = tpu.matmul %55, %1, %cst_11 {dimension_numbers = #tpu.dot_dimension_numbers<[1], [0], [0], [1], [0, 0, 1, 1], [], []>} : vector<8x256xf32>, vector<256x128xf32>, vector<8x128xf32> -> vector<8x128xf32>
    %57 = vector.broadcast %2 : vector<1x128xf32> to vector<8x128xf32>
    %58 = arith.addf %56, %57 : vector<8x128xf32>
    %c0_12 = arith.constant 0 : index
    %c0_13 = arith.constant 0 : index
    %59 = vector.load %arg5[%c0_12, %c0_13] : memref<8x128xf32, #tpu.memory_space<vmem>>, vector<8x128xf32>
    tpu.vector_store %arg5[%c0_12, %c0_13], %58 {strides = array<i32>} : memref<8x128xf32, #tpu.memory_space<vmem>>, vector<8x128xf32>,
    return
  }
  func.func @transform_0(%arg0: i32) -> (i32, i32) {
    %c0_i32 = arith.constant 0 : i32
    %c0_i32_0 = arith.constant 0 : i32
    return %arg0, %c0_i32 : i32, i32
  }
  func.func @transform_1(%arg0: i32) -> (i32, i32) {
    %c0_i32 = arith.constant 0 : i32
    %c0_i32_0 = arith.constant 0 : i32
    %c0_i32_1 = arith.constant 0 : i32
    return %c0_i32, %c0_i32_0 : i32, i32
  }
  func.func @transform_2(%arg0: i32) -> (i32, i32) {
    %c0_i32 = arith.constant 0 : i32
    %c0_i32_0 = arith.constant 0 : i32
    %c0_i32_1 = arith.constant 0 : i32
    return %c0_i32, %c0_i32_0 : i32, i32
  }
  func.func @transform_3(%arg0: i32) -> (i32, i32) {
    %c0_i32 = arith.constant 0 : i32
    %c0_i32_0 = arith.constant 0 : i32
    %c0_i32_1 = arith.constant 0 : i32
    return %c0_i32, %c0_i32_0 : i32, i32
  }
  func.func @transform_4(%arg0: i32) -> (i32, i32) {
    %c0_i32 = arith.constant 0 : i32
    %c0_i32_0 = arith.constant 0 : i32
    return %arg0, %c0_i32 : i32, i32
  }
}

</mosaic_0001>

<llo_original>
// kernel: tpu_custom_call.1
$region0: #{tpu_custom_call.1}
  #allocation0 [shape = 'u32[]', space=smem, size = 0x4, offset = 0x4, fixed_abs, tag = 'smem constant byte address 0x4 - core index']
  #allocation1 [shape = 'u32[144,128]{1,0:T(1,128)}', space=vmem, size = 0x12000, scoped, tag = 'internal scratch']
  %s0 = inlined_call_operand.hbm [shape: f32[8,40], index: 0, kind: input, shape index: {}]
  %s1 = inlined_call_operand.hbm [shape: f32[40,640], index: 1, kind: input, shape index: {}]
  %s2 = inlined_call_operand.hbm [shape: f32[256,128], index: 2, kind: input, shape index: {}]
  %s3 = inlined_call_operand.vmem [shape: f32[1,128], index: 3, kind: input, shape index: {}]
  %s4 = inlined_call_operand.hbm [shape: f32[8,128], index: 4, kind: output, shape index: {}]
  %s5 = sld [smem:[#allocation0]]
  $region38: #{tpu_custom_call.1} parent=0
    _
  %s7 = ssub.s32 1, %s5
  %s8 = scalar_select 0, %s7, %s5
  $region1: #{tpu_custom_call.1} parent=0
    #allocation2 [shape = 'u8[4096]{0}', space=vmem, size = 0x1000, scoped, tag = 'input window, operand 0, single buffered']
    #allocation3 [shape = 's32[1]{0}', space=sflag, size = 0x4, scoped, tag = 'scoped memory for tpu_custom_call.1']
    #allocation4 [shape = 's32[1]{0}', space=sflag, size = 0x4, scoped, tag = 'scoped memory for tpu_custom_call.1']
    #allocation5 [shape = 'u8[102400]{0}', space=vmem, size = 0x19000, scoped, tag = 'input window, operand 1, single buffered']
    #allocation6 [shape = 's32[1]{0}', space=sflag, size = 0x4, scoped, tag = 'scoped memory for tpu_custom_call.1']
    #allocation7 [shape = 'u8[131072]{0}', space=vmem, size = 0x20000, scoped, tag = 'input window, operand 2, single buffered']
    #allocation8 [shape = 'u8[4096]{0}', space=vmem, size = 0x1000, scoped, tag = 'output window, operand 0, single buffered']
    %9 = vsyncpa [#allocation3], 0
    %10 = vsyncpa [#allocation6], 0
    %11 = vsyncpa [#allocation4], 0
    // Predicated region
    $region2: #{tpu_custom_call.1} parent=1 // pred_check
      _
    $region3: #{tpu_custom_call.1} parent=1 // pred_check_branch
      %13 = sbr.rel (0) target = $region5
    $region4: #{tpu_custom_call.1} parent=1 // pred_region
      %s15 = ssub.s32 128, 128
      %16 = vsyncadd [#allocation3], %s15
      %s18 = sshll.u32 [#allocation2], 4
      %s19 = int_to_ptr.vmem [resolvable:$true] %s18
      %21 = dma.hbm_to_vmem [thread:$0]  %s0, 128, %s19, [#allocation3]
    $region5: #{tpu_custom_call.1} parent=1 // pred_fallthru
      _
    // Predicated region
    $region6: #{tpu_custom_call.1} parent=1 // pred_check
      _
    $region7: #{tpu_custom_call.1} parent=1 // pred_check_branch
      %23 = sbr.rel (0) target = $region9
    $region8: #{tpu_custom_call.1} parent=1 // pred_region
      %s25 = ssub.s32 3200, 3200
      %26 = vsyncadd [#allocation6], %s25
      %s27 = sshll.u32 [#allocation5], 4
      %s28 = int_to_ptr.vmem [resolvable:$true] %s27
      %33 = dma.hbm_to_vmem [thread:$0]  %s1, 3200, %s28, [#allocation6], 640, 640, 40
    $region9: #{tpu_custom_call.1} parent=1 // pred_fallthru
      _
    // Predicated region
    $region10: #{tpu_custom_call.1} parent=1 // pred_check
      _
    $region11: #{tpu_custom_call.1} parent=1 // pred_check_branch
      %35 = sbr.rel (0) target = $region13
    $region12: #{tpu_custom_call.1} parent=1 // pred_region
      %s37 = ssub.s32 4096, 4096
      %38 = vsyncadd [#allocation6], %s37
      %s39 = sshll.u32 [#allocation7], 4
      %s40 = int_to_ptr.vmem [resolvable:$true] %s39
      %45 = dma.hbm_to_vmem [thread:$0]  %s2, 4096, %s40, [#allocation6], 128, 128, 8
    $region13: #{tpu_custom_call.1} parent=1 // pred_fallthru
      _
    // Predicated region
    $region14: #{tpu_custom_call.1} parent=1 // pred_check
      _
    $region15: #{tpu_custom_call.1} parent=1 // pred_check_branch
      %47 = sbr.rel (0) target = $region17
    $region16: #{tpu_custom_call.1} parent=1 // pred_region
      _
    $region17: #{tpu_custom_call.1} parent=1 // pred_fallthru
      _
    // Predicated region
    $region18: #{tpu_custom_call.1} parent=1 // pred_check
      _
    $region19: #{tpu_custom_call.1} parent=1 // pred_check_branch
      %49 = sbr.rel (0) target = $region21
    $region20: #{tpu_custom_call.1} parent=1 // pred_region
      %50 = dma.done [#allocation3], 128
    $region21: #{tpu_custom_call.1} parent=1 // pred_fallthru
      _
    // Predicated region
    $region22: #{tpu_custom_call.1} parent=1 // pred_check
      _
    $region23: #{tpu_custom_call.1} parent=1 // pred_check_branch
      %52 = sbr.rel (0) target = $region25
    $region24: #{tpu_custom_call.1} parent=1 // pred_region
      %53 = dma.done [#allocation6], 3200
    $region25: #{tpu_custom_call.1} parent=1 // pred_fallthru
      _
    // Predicated region
    $region26: #{tpu_custom_call.1} parent=1 // pred_check
      _
    $region27: #{tpu_custom_call.1} parent=1 // pred_check_branch
      %55 = sbr.rel (0) target = $region29
    $region28: #{tpu_custom_call.1} parent=1 // pred_region
      %56 = dma.done [#allocation6], 4096
    $region29: #{tpu_custom_call.1} parent=1 // pred_fallthru
      _
    %v57 = vld [vmem:[#allocation5] sm:$0xff]
    %v58 = vld [vmem:[#allocation5 + $0x8] sm:$0xff]
    %v59 = vld [vmem:[#allocation5 + $0x10] sm:$0xff]
    %v60 = vld [vmem:[#allocation5 + $0x18] sm:$0xff]
    %v61 = vld [vmem:[#allocation5 + $0x20] sm:$0xff]
    %v62 = vld [vmem:[#allocation5 + $0x28] sm:$0xff]
    %v63 = vld [vmem:[#allocation5 + $0x30] sm:$0xff]
    %v64 = vld [vmem:[#allocation5 + $0x38] sm:$0xff]
    %v65 = vld [vmem:[#allocation5 + $0x40] sm:$0xff]
    %v66 = vld [vmem:[#allocation5 + $0x48] sm:$0xff]
    %v67 = vld [vmem:[#allocation5 + $0x50] sm:$0xff]
    %v68 = vld [vmem:[#allocation5 + $0x58] sm:$0xff]
    %v69 = vld [vmem:[#allocation5 + $0x60] sm:$0xff]
    %v70 = vld [vmem:[#allocation5 + $0x68] sm:$0xff]
    %v71 = vld [vmem:[#allocation5 + $0x70] sm:$0xff]
    %v72 = vld [vmem:[#allocation5 + $0x78] sm:$0xff]
    %v73 = vld [vmem:[#allocation5 + $0x80] sm:$0xff]
    %v74 = vld [vmem:[#allocation5 + $0x88] sm:$0xff]
    %v75 = vld [vmem:[#allocation5 + $0x90] sm:$0xff]
    %v76 = vld [vmem:[#allocation5 + $0x98] sm:$0xff]
    %v77 = vld [vmem:[#allocation5 + $0xa0] sm:$0xff]
    %v78 = vld [vmem:[#allocation5 + $0xa8] sm:$0xff]
    %v79 = vld [vmem:[#allocation5 + $0xb0] sm:$0xff]
    %v80 = vld [vmem:[#allocation5 + $0xb8] sm:$0xff]
    %v81 = vld [vmem:[#allocation5 + $0xc0] sm:$0xff]
    %v82 = vld [vmem:[#allocation7] sm:$0xff]
    %v83 = vld [vmem:[#allocation7 + $0x8] sm:$0xff]
    %v84 = vld [vmem:[#allocation7 + $0x10] sm:$0xff]
    %v85 = vld [vmem:[#allocation7 + $0x18] sm:$0xff]
    %v86 = vld [vmem:[#allocation7 + $0x20] sm:$0xff]
    %v87 = vld [vmem:[#allocation7 + $0x28] sm:$0xff]
    %v88 = vld [vmem:[#allocation7 + $0x30] sm:$0xff]
    %v89 = vld [vmem:[#allocation7 + $0x38] sm:$0xff]
    %v90 = vld [vmem:[#allocation7 + $0x40] sm:$0xff]
    %v91 = vld [vmem:[#allocation7 + $0x48] sm:$0xff]
    %v92 = vld [vmem:[#allocation7 + $0x50] sm:$0xff]
    %v93 = vld [vmem:[#allocation7 + $0x58] sm:$0xff]
    %v94 = vld [vmem:[#allocation7 + $0x60] sm:$0xff]
    %v95 = vld [vmem:[#allocation7 + $0x68] sm:$0xff]
    %v96 = vld [vmem:[#allocation7 + $0x70] sm:$0xff]
    %v97 = vld [vmem:[#allocation7 + $0x78] sm:$0xff]
    %v98 = vld [vmem:[#allocation7 + $0x80] sm:$0xff]
    %v99 = vld [vmem:[#allocation7 + $0x88] sm:$0xff]
    %v100 = vld [vmem:[#allocation7 + $0x90] sm:$0xff]
    %v101 = vld [vmem:[#allocation7 + $0x98] sm:$0xff]
    %v102 = vld [vmem:[#allocation7 + $0xa0] sm:$0xff]
    %v103 = vld [vmem:[#allocation7 + $0xa8] sm:$0xff]
    %v104 = vld [vmem:[#allocation7 + $0xb0] sm:$0xff]
    %v105 = vld [vmem:[#allocation7 + $0xb8] sm:$0xff]
    %v106 = vld [vmem:[#allocation7 + $0xc0] sm:$0xff]
    %v107 = vld [vmem:[#allocation7 + $0xc8] sm:$0xff]
    %v108 = vld [vmem:[#allocation7 + $0xd0] sm:$0xff]
    %v109 = vld [vmem:[#allocation7 + $0xd8] sm:$0xff]
    %v110 = vld [vmem:[#allocation7 + $0xe0] sm:$0xff]
    %v111 = vld [vmem:[#allocation7 + $0xe8] sm:$0xff]
    %v112 = vld [vmem:[#allocation7 + $0xf0] sm:$0xff]
    %v113 = vld [vmem:[#allocation7 + $0xf8] sm:$0xff]
    %v114 = vld [vmem:[%s3] sm:$0x1]
    %v115 = vld [vmem:[#allocation2] sm:$0xff]
    %vm116 = vcmask 326656
    %v118 = vsel %vm116, %v115, 0
    %120 = vmatprep.subr.mxu0 %v58
    %121 = vmatpush1.msra.mxu0 %v57
    %122 = vmatprep.subr.mxu0 %v63
    %123 = vmatpush1.msra.mxu0 %v62
    %124 = vmatprep.subr.mxu0 %v68
    %125 = vmatpush1.msra.mxu0 %v67
    %126 = vmatprep.subr.mxu0 %v73
    %127 = vmatpush1.msra.mxu0 %v72
    %128 = vmatprep.subr.mxu0 %v78
    %129 = vmatpush1.msra.mxu0 %v77
    %130 = vmatprep.subr.mxu0 0.0
    %131 = vmatpush1.msra.mxu0 0.0
    %132 = vmatprep.subr.mxu0 0.0
    %133 = vmatpush1.msra.mxu0 0.0
    %134 = vmatprep.subr.mxu0 0.0
    %135 = vmatpush1.msra.mxu0 0.0
    %136 = vmatprep.subr.mxu0 0.0
    %137 = vmatpush1.msra.mxu0 0.0
    %138 = vmatprep.subr.mxu0 0.0
    %139 = vmatpush1.msra.mxu0 0.0
    %140 = vmatprep.subr.mxu0 0.0
    %141 = vmatpush1.msra.mxu0 0.0
    %142 = vmatprep.subr.mxu0 0.0
    %143 = vmatpush1.msra.mxu0 0.0
    %144 = vmatprep.subr.mxu0 0.0
    %145 = vmatpush1.msra.mxu0 0.0
    %146 = vmatprep.subr.mxu0 0.0
    %147 = vmatpush1.msra.mxu0 0.0
    %148 = vmatprep.subr.mxu0 0.0
    %149 = vmatpush1.msra.mxu0 0.0
    %150 = vmatprep.subr.mxu0 0.0
    %151 = vmatpush1.msra.mxu0 0.0
    %152 = vmatprep.subr.mxu0 0.0
    %153 = vmatpush1.msra.mxu0 0.0
    %154 = vmatprep.subr.mxu0 0.0
    %155 = vmatpush1.msra.mxu0 0.0
    %156 = vmatprep.subr.mxu0 0.0
    %157 = vmatpush1.msra.mxu0 0.0
    %158 = vmatprep.subr.mxu0 0.0
    %159 = vmatpush1.msra.mxu0 0.0
    %160 = vmatprep.subr.mxu0 0.0
    %161 = vmatpush1.msra.mxu0 0.0
    %162 = vmatprep.subr.mxu0 0.0
    %163 = vmatpush1.msra.mxu0 0.0
    %164 = vmatprep.subr.mxu0 0.0
    %165 = vmatpush1.msra.mxu0 0.0
    %166 = vmatprep.subr.mxu0 0.0
    %167 = vmatpush1.msra.mxu0 0.0
    %168 = vmatprep.subr.mxu0 0.0
    %169 = vmatpush1.msra.mxu0 0.0
    %170 = vmatprep.subr.mxu0 0.0
    %171 = vmatpush1.msra.mxu0 0.0
    %172 = vmatprep.subr.mxu0 0.0
    %173 = vmatpush1.msra.mxu0 0.0
    %174 = vmatprep.subr.mxu0 0.0
    %175 = vmatpush1.msra.mxu0 0.0
    %176 = vmatprep.subr.mxu0 0.0
    %177 = vmatpush1.msra.mxu0 0.0
    %178 = vmatprep.subr.mxu0 0.0
    %179 = vmatpush1.msra.mxu0 0.0
    %180 = vmatprep.subr.mxu0 0.0
    %181 = vmatpush1.msra.mxu0 0.0
    %182 = vmatprep.subr.mxu0 0.0
    %183 = vmatpush1.msra.mxu0 0.0
    %184 = vmatprep.mubr.f32.mxu0 0.0
    %185 = vmatmul.mubr.f32.gmra.mrb[0].mxu0 %v118
    %v186 = vpop.f32.mrb[0].mxu0
    %v187 = vadd.f32 0.0, %v186
    %v188 = vpop.f32.mrb[0].mxu0
    %v189 = vadd.f32 0.0, %v188
    %190 = vdwg.mxu0
    %191 = vmatprep.subr.mxu0 %v60
    %192 = vmatpush1.msra.mxu0 %v59
    %193 = vmatprep.subr.mxu0 %v65
    %194 = vmatpush1.msra.mxu0 %v64
    %195 = vmatprep.subr.mxu0 %v70
    %196 = vmatpush1.msra.mxu0 %v69
    %197 = vmatprep.subr.mxu0 %v75
    %198 = vmatpush1.msra.mxu0 %v74
    %199 = vmatprep.subr.mxu0 %v80
    %200 = vmatpush1.msra.mxu0 %v79
    %201 = vmatprep.subr.mxu0 0.0
    %202 = vmatpush1.msra.mxu0 0.0
    %203 = vmatprep.subr.mxu0 0.0
    %204 = vmatpush1.msra.mxu0 0.0
    %205 = vmatprep.subr.mxu0 0.0
    %206 = vmatpush1.msra.mxu0 0.0
    %207 = vmatprep.subr.mxu0 0.0
    %208 = vmatpush1.msra.mxu0 0.0
    %209 = vmatprep.subr.mxu0 0.0
    %210 = vmatpush1.msra.mxu0 0.0
    %211 = vmatprep.subr.mxu0 0.0
    %212 = vmatpush1.msra.mxu0 0.0
    %213 = vmatprep.subr.mxu0 0.0
    %214 = vmatpush1.msra.mxu0 0.0
    %215 = vmatprep.subr.mxu0 0.0
    %216 = vmatpush1.msra.mxu0 0.0
    %217 = vmatprep.subr.mxu0 0.0
    %218 = vmatpush1.msra.mxu0 0.0
    %219 = vmatprep.subr.mxu0 0.0
    %220 = vmatpush1.msra.mxu0 0.0
    %221 = vmatprep.subr.mxu0 0.0
    %222 = vmatpush1.msra.mxu0 0.0
    %223 = vmatprep.subr.mxu0 0.0
    %224 = vmatpush1.msra.mxu0 0.0
    %225 = vmatprep.subr.mxu0 0.0
    %226 = vmatpush1.msra.mxu0 0.0
    %227 = vmatprep.subr.mxu0 0.0
    %228 = vmatpush1.msra.mxu0 0.0
    %229 = vmatprep.subr.mxu0 0.0
    %230 = vmatpush1.msra.mxu0 0.0
    %231 = vmatprep.subr.mxu0 0.0
    %232 = vmatpush1.msra.mxu0 0.0
    %233 = vmatprep.subr.mxu0 0.0
    %234 = vmatpush1.msra.mxu0 0.0
    %235 = vmatprep.subr.mxu0 0.0
    %236 = vmatpush1.msra.mxu0 0.0
    %237 = vmatprep.subr.mxu0 0.0
    %238 = vmatpush1.msra.mxu0 0.0
    %239 = vmatprep.subr.mxu0 0.0
    %240 = vmatpush1.msra.mxu0 0.0
    %241 = vmatprep.subr.mxu0 0.0
    %242 = vmatpush1.msra.mxu0 0.0
    %243 = vmatprep.subr.mxu0 0.0
    %244 = vmatpush1.msra.mxu0 0.0
    %245 = vmatprep.subr.mxu0 0.0
    %246 = vmatpush1.msra.mxu0 0.0
    %247 = vmatprep.subr.mxu0 0.0
    %248 = vmatpush1.msra.mxu0 0.0
    %249 = vmatprep.subr.mxu0 0.0
    %250 = vmatpush1.msra.mxu0 0.0
    %251 = vmatprep.subr.mxu0 0.0
    %252 = vmatpush1.msra.mxu0 0.0
    %253 = vmatprep.subr.mxu0 0.0
    %254 = vmatpush1.msra.mxu0 0.0
    %255 = vmatprep.mubr.f32.mxu0 0.0
    %256 = vmatmul.mubr.f32.gmra.mrb[0].mxu0 %v118
    %v257 = vpop.f32.mrb[0].mxu0
    %v258 = vadd.f32 0.0, %v257
    %v259 = vpop.f32.mrb[0].mxu0
    %v260 = vadd.f32 0.0, %v259
    %261 = vdwg.mxu0
    %262 = vmatprep.subr.mxu0 0.0
    %263 = vmatpush1.msra.mxu0 %v61
    %264 = vmatprep.subr.mxu0 0.0
    %265 = vmatpush1.msra.mxu0 %v66
    %266 = vmatprep.subr.mxu0 0.0
    %267 = vmatpush1.msra.mxu0 %v71
    %268 = vmatprep.subr.mxu0 0.0
    %269 = vmatpush1.msra.mxu0 %v76
    %270 = vmatprep.subr.mxu0 0.0
    %271 = vmatpush1.msra.mxu0 %v81
    %272 = vmatprep.subr.mxu0 0.0
    %273 = vmatpush1.msra.mxu0 0.0
    %274 = vmatprep.subr.mxu0 0.0
    %275 = vmatpush1.msra.mxu0 0.0
    %276 = vmatprep.subr.mxu0 0.0
    %277 = vmatpush1.msra.mxu0 0.0
    %278 = vmatprep.subr.mxu0 0.0
    %279 = vmatpush1.msra.mxu0 0.0
    %280 = vmatprep.subr.mxu0 0.0
    %281 = vmatpush1.msra.mxu0 0.0
    %282 = vmatprep.subr.mxu0 0.0
    %283 = vmatpush1.msra.mxu0 0.0
    %284 = vmatprep.subr.mxu0 0.0
    %285 = vmatpush1.msra.mxu0 0.0
    %286 = vmatprep.subr.mxu0 0.0
    %287 = vmatpush1.msra.mxu0 0.0
    %288 = vmatprep.subr.mxu0 0.0
    %289 = vmatpush1.msra.mxu0 0.0
    %290 = vmatprep.subr.mxu0 0.0
    %291 = vmatpush1.msra.mxu0 0.0
    %292 = vmatprep.subr.mxu0 0.0
    %293 = vmatpush1.msra.mxu0 0.0
    %294 = vmatprep.subr.mxu0 0.0
    %295 = vmatpush1.msra.mxu0 0.0
    %296 = vmatprep.subr.mxu0 0.0
    %297 = vmatpush1.msra.mxu0 0.0
    %298 = vmatprep.subr.mxu0 0.0
    %299 = vmatpush1.msra.mxu0 0.0
    %300 = vmatprep.subr.mxu0 0.0
    %301 = vmatpush1.msra.mxu0 0.0
    %302 = vmatprep.subr.mxu0 0.0
    %303 = vmatpush1.msra.mxu0 0.0
    %304 = vmatprep.subr.mxu0 0.0
    %305 = vmatpush1.msra.mxu0 0.0
    %306 = vmatprep.subr.mxu0 0.0
    %307 = vmatpush1.msra.mxu0 0.0
    %308 = vmatprep.subr.mxu0 0.0
    %309 = vmatpush1.msra.mxu0 0.0
    %310 = vmatprep.subr.mxu0 0.0
    %311 = vmatpush1.msra.mxu0 0.0
    %312 = vmatprep.subr.mxu0 0.0
    %313 = vmatpush1.msra.mxu0 0.0
    %314 = vmatprep.subr.mxu0 0.0
    %315 = vmatpush1.msra.mxu0 0.0
    %316 = vmatprep.subr.mxu0 0.0
    %317 = vmatpush1.msra.mxu0 0.0
    %318 = vmatprep.subr.mxu0 0.0
    %319 = vmatpush1.msra.mxu0 0.0
    %320 = vmatprep.subr.mxu0 0.0
    %321 = vmatpush1.msra.mxu0 0.0
    %322 = vmatprep.subr.mxu0 0.0
    %323 = vmatpush1.msra.mxu0 0.0
    %324 = vmatprep.subr.mxu0 0.0
    %325 = vmatpush1.msra.mxu0 0.0
    %326 = vmatprep.mubr.f32.mxu0 0.0
    %327 = vmatmul.mubr.f32.gmra.mrb[0].mxu0 %v118
    %v328 = vpop.f32.mrb[0].mxu0
    %v329 = vadd.f32 0.0, %v328
    %v330 = vpop.f32.mrb[0].mxu0
    %331 = vdwg.mxu0
    %332 = vmax.xlane.f32.xlu0 %v260
    %v333 = vpop.xlane.xlu0 %332
    %v334 = vsub.f32 %v260, %v333
    %v335 = vmul.f32 %v334, 1.442695
    %v336 = vpow.pop %v335
    %337 = vadd.xlane.f32.xlu0 %v336
    %v338 = vpop.xlane.xlu0 %337
    %v339 = vrcp.pop %v338
    %v340 = vmul.f32 %v336, %v339
    %342 = vset.pattern.permute.xlu0 0
    %343 = vperm.xlu0 %342, %v340
    %v344 = vpop.permute.xlu0 %343
    %v346 = vmul.f32 %v187, %v344
    %347 = vset.pattern.permute.xlu0 1
    %348 = vperm.xlu0 %347, %v340
    %v349 = vpop.permute.xlu0 %348
    %v351 = vmul.f32 %v189, %v349
    %v352 = vadd.f32 %v346, %v351
    %353 = vset.pattern.permute.xlu0 2
    %354 = vperm.xlu0 %353, %v340
    %v355 = vpop.permute.xlu0 %354
    %v357 = vmul.f32 %v258, %v355
    %v358 = vadd.f32 %v352, %v357
    %359 = vmax.xlane.f32.xlu0 %v329
    %v360 = vpop.xlane.xlu0 %359
    %v361 = vsub.f32 %v329, %v360
    %v362 = vmul.f32 %v361, 1.442695
    %v363 = vpow.pop %v362
    %364 = vadd.xlane.f32.xlu0 %v363
    %v365 = vpop.xlane.xlu0 %364
    %v366 = vrcp.pop %v365
    %v367 = vmul.f32 %v363, %v366
    %369 = vset.pattern.permute.xlu0 0
    %370 = vperm.xlu0 %369, %v367
    %v371 = vpop.permute.xlu0 %370
    %v373 = vmul.f32 %v187, %v371
    %374 = vset.pattern.permute.xlu0 1
    %375 = vperm.xlu0 %374, %v367
    %v376 = vpop.permute.xlu0 %375
    %v378 = vmul.f32 %v189, %v376
    %v379 = vadd.f32 %v373, %v378
    %380 = vset.pattern.permute.xlu0 2
    %381 = vperm.xlu0 %380, %v367
    %v382 = vpop.permute.xlu0 %381
    %v384 = vmul.f32 %v258, %v382
    %v385 = vadd.f32 %v379, %v384
    %v387 = vlaneseq
    %v388 = vshrl.u32 %v387, 7
    %v389 = vsub.s32 0, %v388
    %v390 = vrot.slane %v114, %v389
    %392 = vmatprep.subr.mxu0 0.0
    %393 = vmatpush1.msra.mxu0 %v82
    %394 = vmatprep.subr.mxu0 0.0
    %395 = vmatpush1.msra.mxu0 %v83
    %396 = vmatprep.subr.mxu0 0.0
    %397 = vmatpush1.msra.mxu0 %v84
    %398 = vmatprep.subr.mxu0 0.0
    %399 = vmatpush1.msra.mxu0 %v85
    %400 = vmatprep.subr.mxu0 0.0
    %401 = vmatpush1.msra.mxu0 %v86
    %402 = vmatprep.subr.mxu0 0.0
    %403 = vmatpush1.msra.mxu0 %v87
    %404 = vmatprep.subr.mxu0 0.0
    %405 = vmatpush1.msra.mxu0 %v88
    %406 = vmatprep.subr.mxu0 0.0
    %407 = vmatpush1.msra.mxu0 %v89
    %408 = vmatprep.subr.mxu0 0.0
    %409 = vmatpush1.msra.mxu0 %v90
    %410 = vmatprep.subr.mxu0 0.0
    %411 = vmatpush1.msra.mxu0 %v91
    %412 = vmatprep.subr.mxu0 0.0
    %413 = vmatpush1.msra.mxu0 %v92
    %414 = vmatprep.subr.mxu0 0.0
    %415 = vmatpush1.msra.mxu0 %v93
    %416 = vmatprep.subr.mxu0 0.0
    %417 = vmatpush1.msra.mxu0 %v94
    %418 = vmatprep.subr.mxu0 0.0
    %419 = vmatpush1.msra.mxu0 %v95
    %420 = vmatprep.subr.mxu0 0.0
    %421 = vmatpush1.msra.mxu0 %v96
    %422 = vmatprep.subr.mxu0 0.0
    %423 = vmatpush1.msra.mxu0 %v97
    %424 = vmatprep.subr.mxu0 0.0
    %425 = vmatpush1.msra.mxu0 %v98
    %426 = vmatprep.subr.mxu0 0.0
    %427 = vmatpush1.msra.mxu0 %v99
    %428 = vmatprep.subr.mxu0 0.0
    %429 = vmatpush1.msra.mxu0 %v100
    %430 = vmatprep.subr.mxu0 0.0
    %431 = vmatpush1.msra.mxu0 %v101
    %432 = vmatprep.subr.mxu0 0.0
    %433 = vmatpush1.msra.mxu0 %v102
    %434 = vmatprep.subr.mxu0 0.0
    %435 = vmatpush1.msra.mxu0 %v103
    %436 = vmatprep.subr.mxu0 0.0
    %437 = vmatpush1.msra.mxu0 %v104
    %438 = vmatprep.subr.mxu0 0.0
    %439 = vmatpush1.msra.mxu0 %v105
    %440 = vmatprep.subr.mxu0 0.0
    %441 = vmatpush1.msra.mxu0 %v106
    %442 = vmatprep.subr.mxu0 0.0
    %443 = vmatpush1.msra.mxu0 %v107
    %444 = vmatprep.subr.mxu0 0.0
    %445 = vmatpush1.msra.mxu0 %v108
    %446 = vmatprep.subr.mxu0 0.0
    %447 = vmatpush1.msra.mxu0 %v109
    %448 = vmatprep.subr.mxu0 0.0
    %449 = vmatpush1.msra.mxu0 %v110
    %450 = vmatprep.subr.mxu0 0.0
    %451 = vmatpush1.msra.mxu0 %v111
    %452 = vmatprep.subr.mxu0 0.0
    %453 = vmatpush1.msra.mxu0 %v112
    %454 = vmatprep.subr.mxu0 0.0
    %455 = vmatpush1.msra.mxu0 %v113
    %456 = vmatprep.mubr.f32.mxu0 %v385
    %457 = vmatmul.mubr.f32.gmra.mrb[0].mxu0 %v358
    %v458 = vpop.f32.mrb[0].mxu0
    %v459 = vadd.f32 %v390, %v458
    %v460 = vpop.f32.mrb[0].mxu0
    %461 = vdwg.mxu0
    %462 = vst [vmem:[#allocation8] sm:$0xff] %v459
    // Predicated region
    $region30: #{tpu_custom_call.1} parent=1 // pred_check
      _
    $region31: #{tpu_custom_call.1} parent=1 // pred_check_branch
      %464 = sbr.rel (0) target = $region33
    $region32: #{tpu_custom_call.1} parent=1 // pred_region
      %s466 = ssub.s32 128, 128
      %467 = vsyncadd [#allocation4], %s466
      %s469 = sshll.u32 [#allocation8], 4
      %s470 = int_to_ptr.vmem [resolvable:$true] %s469
      %472 = dma.vmem_to_hbm [thread:$0]  %s470, 128, %s4, [#allocation4]
    $region33: #{tpu_custom_call.1} parent=1 // pred_fallthru
      _
    // Predicated region
    $region34: #{tpu_custom_call.1} parent=1 // pred_check
      _
    $region35: #{tpu_custom_call.1} parent=1 // pred_check_branch
      %474 = sbr.rel (0) target = $region37
    $region36: #{tpu_custom_call.1} parent=1 // pred_region
      %475 = dma.done [#allocation4], 128
    $region37: #{tpu_custom_call.1} parent=1 // pred_fallthru
      _
    %476 = vsyncpa [#allocation3], 1
    %477 = vsyncpa [#allocation6], 1
    %478 = vsyncpa [#allocation4], 1

</llo_original>
